<compile_context>
chip_gen: v7x
topology: tpu7x:2x2x1
jax: 0.10.0
libtpu: 0.0.40
codegen_flags: <defaults>
</compile_context>

<pallas_src>
import functools

import jax
import jax.numpy as jnp
from jax.experimental import pallas as pl
from jax.experimental.pallas import tpu as pltpu


# ----------------------------------------------------------------------------
# Fused flow kernel: single invocation, all L layers unrolled in-kernel.
# ----------------------------------------------------------------------------
def _fused_flow_kernel(x_ref, mask_ref, w1_ref, b1_ref, w2_ref, b2_ref,
                       z_ref, ld_ref, *, num_layers, reverse):
    x = x_ref[...].astype(jnp.float32)             # [B, D] running flow state
    B, D = x.shape
    ld_sum = jnp.zeros((B, 1), jnp.float32)        # running log-det

    # reversed() of the PyTorch module == apply layers in reverse (static order).
    order = range(num_layers - 1, -1, -1) if reverse else range(num_layers)

    for l in order:                                # fully unrolled
        mask = mask_ref[l]                         # [1, D]  (binary)
        inv = 1.0 - mask                           # [1, D]
        mx = x * mask

        # Fused first layers of scale_net & translation_net: one [D, 2H] matmul.
        h = jnp.dot(mx, w1_ref[l], preferred_element_type=jnp.float32) + b1_ref[l]
        h = jnp.maximum(h, 0.01 * h)               # LeakyReLU(0.01)

        # Fused second layers via block-diagonal [2H, 2D] weight -> [B, 2D].
        st = jnp.dot(h, w2_ref[l], preferred_element_type=jnp.float32) + b2_ref[l]

        scale = jnp.tanh(st[:, :D]) * inv          # masked scale
        trans = st[:, D:] * inv                    # masked translation

        if not reverse:
            # inv * trans == trans (trans already masked, inv binary).
            x = mx + inv * x * jnp.exp(scale) + trans
            ld_sum = ld_sum + jnp.sum(scale, axis=1, keepdims=True)  # scale masked
        else:
            x = mx + inv * (x - trans) * jnp.exp(-scale)
            ld_sum = ld_sum - jnp.sum(scale, axis=1, keepdims=True)

    z_ref[...] = x.astype(z_ref.dtype)
    ld_ref[...] = ld_sum.astype(ld_ref.dtype)


# ----------------------------------------------------------------------------
# Python wrapper: one pallas_call for the whole flow, everything in VMEM.
# ----------------------------------------------------------------------------
def realnvp_forward(x, stacked, *, reverse=False):
    """RealNVP.forward (all layers fused into one Pallas kernel invocation)."""
    B, D = x.shape
    L = stacked["mask"].shape[0]

    kernel = functools.partial(_fused_flow_kernel, num_layers=L, reverse=reverse)
    vmem = pl.BlockSpec(memory_space=pltpu.MemorySpace.VMEM)
    z, ld = pl.pallas_call(
        kernel,
        out_shape=(
            jax.ShapeDtypeStruct((B, D), jnp.float32),
            jax.ShapeDtypeStruct((B, 1), jnp.float32),
        ),
        in_specs=[vmem] * 6,
        out_specs=(vmem, vmem),
    )(x, stacked["mask"], stacked["w1"], stacked["b1"],
      stacked["w2"], stacked["b2"])
    return z, ld[:, 0]


# ----------------------------------------------------------------------------
# Parameter construction (matches PyTorch CouplingLayer shapes) + fusion/stacking.
# ----------------------------------------------------------------------------
def make_flow_params(key, input_dim, hidden_dim, num_layers):
    flows = []
    for i in range(num_layers):
        mask = jnp.ones((input_dim,), jnp.float32)
        mask = mask.at[::2].set(0.0 if i % 2 == 0 else 1.0)
        keys = jax.random.split(jax.random.fold_in(key, i), 8)
        sc = 0.1
        flows.append({
            "mask": mask,
            # scale_net: Linear(D,H) -> LeakyReLU -> Linear(H,D) -> Tanh
            "w1s": sc * jax.random.normal(keys[0], (input_dim, hidden_dim), jnp.float32),
            "b1s": sc * jax.random.normal(keys[1], (hidden_dim,), jnp.float32),
            "w2s": sc * jax.random.normal(keys[2], (hidden_dim, input_dim), jnp.float32),
            "b2s": sc * jax.random.normal(keys[3], (input_dim,), jnp.float32),
            # translation_net: Linear(D,H) -> LeakyReLU -> Linear(H,D)
            "w1t": sc * jax.random.normal(keys[4], (input_dim, hidden_dim), jnp.float32),
            "b1t": sc * jax.random.normal(keys[5], (hidden_dim,), jnp.float32),
            "w2t": sc * jax.random.normal(keys[6], (hidden_dim, input_dim), jnp.float32),
            "b2t": sc * jax.random.normal(keys[7], (input_dim,), jnp.float32),
        })
    return flows


def stack_flow_params(flows):
    """Fuse scale/translation nets and stack all layers into [L, ...] arrays."""
    D, H = flows[0]["w1s"].shape
    masks, w1s, b1s, w2s, b2s = [], [], [], [], []
    for p in flows:
        masks.append(p["mask"].reshape(1, D))
        # first layers side-by-side: [D, 2H]
        w1s.append(jnp.concatenate([p["w1s"], p["w1t"]], axis=1))
        b1s.append(jnp.concatenate([p["b1s"], p["b1t"]], axis=0).reshape(1, 2 * H))
        # second layers block-diagonal: [2H, 2D] (free at H=32, D=8; see TODO above)
        w2 = jnp.zeros((2 * H, 2 * D), jnp.float32)
        w2 = w2.at[:H, :D].set(p["w2s"]).at[H:, D:].set(p["w2t"])
        w2s.append(w2)
        b2s.append(jnp.concatenate([p["b2s"], p["b2t"]], axis=0).reshape(1, 2 * D))
    return {
        "mask": jnp.stack(masks),  # [L, 1, D]
        "w1": jnp.stack(w1s),      # [L, D, 2H]
        "b1": jnp.stack(b1s),      # [L, 1, 2H]
        "w2": jnp.stack(w2s),      # [L, 2H, 2D]
        "b2": jnp.stack(b2s),      # [L, 1, 2D]
    }


# ----------------------------------------------------------------------------
# Pure-JAX reference of the PyTorch module math (for correctness check only).
# ----------------------------------------------------------------------------
def _leaky(v):
    return jnp.where(v > 0, v, 0.01 * v)


def realnvp_reference(x, flows, *, reverse=False):
    ld_sum = jnp.zeros((x.shape[0],), jnp.float32)
    order = flows if not reverse else list(reversed(flows))
    for p in order:
        mask = p["mask"][None, :]
        inv = 1.0 - mask
        mx = x * mask
        scale = jnp.tanh(_leaky(mx @ p["w1s"] + p["b1s"]) @ p["w2s"] + p["b2s"]) * inv
        trans = (_leaky(mx @ p["w1t"] + p["b1t"]) @ p["w2t"] + p["b2t"]) * inv
        if not reverse:
            x = mx + inv * (x * jnp.exp(scale) + trans)
            ld = jnp.sum(scale * inv, axis=1)
        else:
            x = mx + inv * ((x - trans) * jnp.exp(-scale))
            ld = -jnp.sum(scale * inv, axis=1)
        ld_sum = ld_sum + ld
    return x, ld_sum


if __name__ == "__main__":
    key = jax.random.PRNGKey(0)
    B, D, H, L = 2, 8, 32, 4   # batch, input_dim (latent), hidden_dim, num_flows

    kx, kp = jax.random.split(key)
    x = jax.random.normal(kx, (B, D), jnp.float32)
    flows = make_flow_params(kp, D, H, L)
    stacked = stack_flow_params(flows)

    # forward flow (single fused Pallas kernel invocation)
    z, log_det = realnvp_forward(x, stacked, reverse=False)
    jax.block_until_ready(z)
    jax.block_until_ready(log_det)
    assert z.shape == (B, D) and log_det.shape == (B,)

    # correctness vs. pure-JAX reference of the PyTorch math
    z_ref, ld_ref = realnvp_reference(x, flows, reverse=False)
    assert jnp.max(jnp.abs(z - z_ref)) < 1e-4
    assert jnp.max(jnp.abs(log_det - ld_ref)) < 1e-4

    # reverse path: invert the flow and check we recover x, log-dets cancel
    x_rec, ld_rev = realnvp_forward(z, stacked, reverse=True)
    jax.block_until_ready(x_rec)
    assert jnp.max(jnp.abs(x_rec - x)) < 1e-4
    assert jnp.max(jnp.abs(log_det + ld_rev)) < 1e-4

    print("KERNEL_OK")
</pallas_src>

<mosaic_0001>
module attributes {stable_mosaic.version = 11 : i64} {
  func.func @_fused_flow_kernel(%arg0: memref<2x8xf32, #tpu.memory_space<vmem>>, %arg1: memref<4x1x8xf32, #tpu.memory_space<vmem>>, %arg2: memref<4x8x64xf32, #tpu.memory_space<vmem>>, %arg3: memref<4x1x64xf32, #tpu.memory_space<vmem>>, %arg4: memref<4x64x16xf32, #tpu.memory_space<vmem>>, %arg5: memref<4x1x16xf32, #tpu.memory_space<vmem>>, %arg6: memref<2x8xf32, #tpu.memory_space<vmem>>, %arg7: memref<2x1xf32, #tpu.memory_space<vmem>>) attributes {dimension_semantics = [], scalar_prefetch = 0 : i64, scratch_operands = 0 : i64, tpu.core_type = #tpu.core_type<tc>} {
    %c0 = arith.constant 0 : index
    %c0_0 = arith.constant 0 : index
    %0 = vector.load %arg0[%c0, %c0_0] : memref<2x8xf32, #tpu.memory_space<vmem>>, vector<2x8xf32>
    %cst = arith.constant 0.000000e+00 : f32
    %1 = vector.broadcast %cst : f32 to vector<2x1xf32>
    %c0_1 = arith.constant 0 : index
    %c0_2 = arith.constant 0 : index
    %c0_3 = arith.constant 0 : index
    %2 = vector.load %arg1[%c0_1, %c0_2, %c0_3] : memref<4x1x8xf32, #tpu.memory_space<vmem>>, vector<1x1x8xf32>
    %3 = vector.shape_cast %2 : vector<1x1x8xf32> to vector<1x8xf32>
    %cst_4 = arith.constant 1.000000e+00 : f32
    %4 = vector.broadcast %cst_4 : f32 to vector<1x8xf32>
    %5 = arith.subf %4, %3 : vector<1x8xf32>
    %6 = vector.broadcast %3 : vector<1x8xf32> to vector<2x8xf32>
    %7 = arith.mulf %0, %6 : vector<2x8xf32>
    %c0_5 = arith.constant 0 : index
    %c0_6 = arith.constant 0 : index
    %c0_7 = arith.constant 0 : index
    %8 = vector.load %arg2[%c0_5, %c0_6, %c0_7] : memref<4x8x64xf32, #tpu.memory_space<vmem>>, vector<1x8x64xf32>
    %9 = vector.shape_cast %8 : vector<1x8x64xf32> to vector<8x64xf32>
    %cst_8 = arith.constant dense<0.000000e+00> : vector<2x64xf32>
    %10 = tpu.matmul %7, %9, %cst_8 {dimension_numbers = #tpu.dot_dimension_numbers<[1], [0], [0], [1], [0, 0, 1, 1], [], []>} : vector<2x8xf32>, vector<8x64xf32>, vector<2x64xf32> -> vector<2x64xf32>
    %c0_9 = arith.constant 0 : index
    %c0_10 = arith.constant 0 : index
    %c0_11 = arith.constant 0 : index
    %11 = vector.load %arg3[%c0_9, %c0_10, %c0_11] : memref<4x1x64xf32, #tpu.memory_space<vmem>>, vector<1x1x64xf32>
    %12 = vector.shape_cast %11 : vector<1x1x64xf32> to vector<1x64xf32>
    %13 = vector.broadcast %12 : vector<1x64xf32> to vector<2x64xf32>
    %14 = arith.addf %10, %13 : vector<2x64xf32>
    %cst_12 = arith.constant 0.00999999977 : f32
    %15 = vector.broadcast %cst_12 : f32 to vector<2x64xf32>
    %16 = arith.mulf %15, %14 : vector<2x64xf32>
    %17 = arith.maximumf %14, %16 : vector<2x64xf32>
    %c0_13 = arith.constant 0 : index
    %c0_14 = arith.constant 0 : index
    %c0_15 = arith.constant 0 : index
    %18 = vector.load %arg4[%c0_13, %c0_14, %c0_15] : memref<4x64x16xf32, #tpu.memory_space<vmem>>, vector<1x64x16xf32>
    %19 = vector.shape_cast %18 : vector<1x64x16xf32> to vector<64x16xf32>
    %cst_16 = arith.constant dense<0.000000e+00> : vector<2x16xf32>
    %20 = tpu.matmul %17, %19, %cst_16 {dimension_numbers = #tpu.dot_dimension_numbers<[1], [0], [0], [1], [0, 0, 1, 1], [], []>} : vector<2x64xf32>, vector<64x16xf32>, vector<2x16xf32> -> vector<2x16xf32>
    %c0_17 = arith.constant 0 : index
    %c0_18 = arith.constant 0 : index
    %c0_19 = arith.constant 0 : index
    %21 = vector.load %arg5[%c0_17, %c0_18, %c0_19] : memref<4x1x16xf32, #tpu.memory_space<vmem>>, vector<1x1x16xf32>
    %22 = vector.shape_cast %21 : vector<1x1x16xf32> to vector<1x16xf32>
    %23 = vector.broadcast %22 : vector<1x16xf32> to vector<2x16xf32>
    %24 = arith.addf %20, %23 : vector<2x16xf32>
    %25 = vector.extract_strided_slice %24 {offsets = [0, 0], sizes = [2, 8], strides = [1, 1]} : vector<2x16xf32> to vector<2x8xf32>
    %26 = math.tanh %25 : vector<2x8xf32>
    %27 = vector.broadcast %5 : vector<1x8xf32> to vector<2x8xf32>
    %28 = arith.mulf %26, %27 : vector<2x8xf32>
    %29 = vector.extract_strided_slice %24 {offsets = [0, 8], sizes = [2, 8], strides = [1, 1]} : vector<2x16xf32> to vector<2x8xf32>
    %30 = vector.broadcast %5 : vector<1x8xf32> to vector<2x8xf32>
    %31 = arith.mulf %29, %30 : vector<2x8xf32>
    %32 = vector.broadcast %5 : vector<1x8xf32> to vector<2x8xf32>
    %33 = arith.mulf %32, %0 : vector<2x8xf32>
    %34 = math.exp %28 : vector<2x8xf32>
    %35 = arith.mulf %33, %34 : vector<2x8xf32>
    %36 = arith.addf %7, %35 : vector<2x8xf32>
    %37 = arith.addf %36, %31 : vector<2x8xf32>
    %cst_20 = arith.constant dense<0.000000e+00> : vector<2xf32>
    %38 = vector.multi_reduction <add>, %28, %cst_20 [1] : vector<2x8xf32> to vector<2xf32>
    %39 = vector.shape_cast %38 : vector<2xf32> to vector<2x1xf32>
    %40 = arith.addf %1, %39 : vector<2x1xf32>
    %c1 = arith.constant 1 : index
    %c0_21 = arith.constant 0 : index
    %c0_22 = arith.constant 0 : index
    %41 = vector.load %arg1[%c1, %c0_21, %c0_22] : memref<4x1x8xf32, #tpu.memory_space<vmem>>, vector<1x1x8xf32>
    %42 = vector.shape_cast %41 : vector<1x1x8xf32> to vector<1x8xf32>
    %cst_23 = arith.constant 1.000000e+00 : f32
    %43 = vector.broadcast %cst_23 : f32 to vector<1x8xf32>
    %44 = arith.subf %43, %42 : vector<1x8xf32>
    %45 = vector.broadcast %42 : vector<1x8xf32> to vector<2x8xf32>
    %46 = arith.mulf %37, %45 : vector<2x8xf32>
    %c1_24 = arith.constant 1 : index
    %c0_25 = arith.constant 0 : index
    %c0_26 = arith.constant 0 : index
    %47 = vector.load %arg2[%c1_24, %c0_25, %c0_26] : memref<4x8x64xf32, #tpu.memory_space<vmem>>, vector<1x8x64xf32>
    %48 = vector.shape_cast %47 : vector<1x8x64xf32> to vector<8x64xf32>
    %cst_27 = arith.constant dense<0.000000e+00> : vector<2x64xf32>
    %49 = tpu.matmul %46, %48, %cst_27 {dimension_numbers = #tpu.dot_dimension_numbers<[1], [0], [0], [1], [0, 0, 1, 1], [], []>} : vector<2x8xf32>, vector<8x64xf32>, vector<2x64xf32> -> vector<2x64xf32>
    %c1_28 = arith.constant 1 : index
    %c0_29 = arith.constant 0 : index
    %c0_30 = arith.constant 0 : index
    %50 = vector.load %arg3[%c1_28, %c0_29, %c0_30] : memref<4x1x64xf32, #tpu.memory_space<vmem>>, vector<1x1x64xf32>
    %51 = vector.shape_cast %50 : vector<1x1x64xf32> to vector<1x64xf32>
    %52 = vector.broadcast %51 : vector<1x64xf32> to vector<2x64xf32>
    %53 = arith.addf %49, %52 : vector<2x64xf32>
    %cst_31 = arith.constant 0.00999999977 : f32
    %54 = vector.broadcast %cst_31 : f32 to vector<2x64xf32>
    %55 = arith.mulf %54, %53 : vector<2x64xf32>
    %56 = arith.maximumf %53, %55 : vector<2x64xf32>
    %c1_32 = arith.constant 1 : index
    %c0_33 = arith.constant 0 : index
    %c0_34 = arith.constant 0 : index
    %57 = vector.load %arg4[%c1_32, %c0_33, %c0_34] : memref<4x64x16xf32, #tpu.memory_space<vmem>>, vector<1x64x16xf32>
    %58 = vector.shape_cast %57 : vector<1x64x16xf32> to vector<64x16xf32>
    %cst_35 = arith.constant dense<0.000000e+00> : vector<2x16xf32>
    %59 = tpu.matmul %56, %58, %cst_35 {dimension_numbers = #tpu.dot_dimension_numbers<[1], [0], [0], [1], [0, 0, 1, 1], [], []>} : vector<2x64xf32>, vector<64x16xf32>, vector<2x16xf32> -> vector<2x16xf32>
    %c1_36 = arith.constant 1 : index
    %c0_37 = arith.constant 0 : index
    %c0_38 = arith.constant 0 : index
    %60 = vector.load %arg5[%c1_36, %c0_37, %c0_38] : memref<4x1x16xf32, #tpu.memory_space<vmem>>, vector<1x1x16xf32>
    %61 = vector.shape_cast %60 : vector<1x1x16xf32> to vector<1x16xf32>
    %62 = vector.broadcast %61 : vector<1x16xf32> to vector<2x16xf32>
    %63 = arith.addf %59, %62 : vector<2x16xf32>
    %64 = vector.extract_strided_slice %63 {offsets = [0, 0], sizes = [2, 8], strides = [1, 1]} : vector<2x16xf32> to vector<2x8xf32>
    %65 = math.tanh %64 : vector<2x8xf32>
    %66 = vector.broadcast %44 : vector<1x8xf32> to vector<2x8xf32>
    %67 = arith.mulf %65, %66 : vector<2x8xf32>
    %68 = vector.extract_strided_slice %63 {offsets = [0, 8], sizes = [2, 8], strides = [1, 1]} : vector<2x16xf32> to vector<2x8xf32>
    %69 = vector.broadcast %44 : vector<1x8xf32> to vector<2x8xf32>
    %70 = arith.mulf %68, %69 : vector<2x8xf32>
    %71 = vector.broadcast %44 : vector<1x8xf32> to vector<2x8xf32>
    %72 = arith.mulf %71, %37 : vector<2x8xf32>
    %73 = math.exp %67 : vector<2x8xf32>
    %74 = arith.mulf %72, %73 : vector<2x8xf32>
    %75 = arith.addf %46, %74 : vector<2x8xf32>
    %76 = arith.addf %75, %70 : vector<2x8xf32>
    %cst_39 = arith.constant dense<0.000000e+00> : vector<2xf32>
    %77 = vector.multi_reduction <add>, %67, %cst_39 [1] : vector<2x8xf32> to vector<2xf32>
    %78 = vector.shape_cast %77 : vector<2xf32> to vector<2x1xf32>
    %79 = arith.addf %40, %78 : vector<2x1xf32>
    %c2 = arith.constant 2 : index
    %c0_40 = arith.constant 0 : index
    %c0_41 = arith.constant 0 : index
    %80 = vector.load %arg1[%c2, %c0_40, %c0_41] : memref<4x1x8xf32, #tpu.memory_space<vmem>>, vector<1x1x8xf32>
    %81 = vector.shape_cast %80 : vector<1x1x8xf32> to vector<1x8xf32>
    %cst_42 = arith.constant 1.000000e+00 : f32
    %82 = vector.broadcast %cst_42 : f32 to vector<1x8xf32>
    %83 = arith.subf %82, %81 : vector<1x8xf32>
    %84 = vector.broadcast %81 : vector<1x8xf32> to vector<2x8xf32>
    %85 = arith.mulf %76, %84 : vector<2x8xf32>
    %c2_43 = arith.constant 2 : index
    %c0_44 = arith.constant 0 : index
    %c0_45 = arith.constant 0 : index
    %86 = vector.load %arg2[%c2_43, %c0_44, %c0_45] : memref<4x8x64xf32, #tpu.memory_space<vmem>>, vector<1x8x64xf32>
    %87 = vector.shape_cast %86 : vector<1x8x64xf32> to vector<8x64xf32>
    %cst_46 = arith.constant dense<0.000000e+00> : vector<2x64xf32>
    %88 = tpu.matmul %85, %87, %cst_46 {dimension_numbers = #tpu.dot_dimension_numbers<[1], [0], [0], [1], [0, 0, 1, 1], [], []>} : vector<2x8xf32>, vector<8x64xf32>, vector<2x64xf32> -> vector<2x64xf32>
    %c2_47 = arith.constant 2 : index
    %c0_48 = arith.constant 0 : index
    %c0_49 = arith.constant 0 : index
    %89 = vector.load %arg3[%c2_47, %c0_48, %c0_49] : memref<4x1x64xf32, #tpu.memory_space<vmem>>, vector<1x1x64xf32>
    %90 = vector.shape_cast %89 : vector<1x1x64xf32> to vector<1x64xf32>
    %91 = vector.broadcast %90 : vector<1x64xf32> to vector<2x64xf32>
    %92 = arith.addf %88, %91 : vector<2x64xf32>
    %cst_50 = arith.constant 0.00999999977 : f32
    %93 = vector.broadcast %cst_50 : f32 to vector<2x64xf32>
    %94 = arith.mulf %93, %92 : vector<2x64xf32>
    %95 = arith.maximumf %92, %94 : vector<2x64xf32>
    %c2_51 = arith.constant 2 : index
    %c0_52 = arith.constant 0 : index
    %c0_53 = arith.constant 0 : index
    %96 = vector.load %arg4[%c2_51, %c0_52, %c0_53] : memref<4x64x16xf32, #tpu.memory_space<vmem>>, vector<1x64x16xf32>
    %97 = vector.shape_cast %96 : vector<1x64x16xf32> to vector<64x16xf32>
    %cst_54 = arith.constant dense<0.000000e+00> : vector<2x16xf32>
    %98 = tpu.matmul %95, %97, %cst_54 {dimension_numbers = #tpu.dot_dimension_numbers<[1], [0], [0], [1], [0, 0, 1, 1], [], []>} : vector<2x64xf32>, vector<64x16xf32>, vector<2x16xf32> -> vector<2x16xf32>
    %c2_55 = arith.constant 2 : index
    %c0_56 = arith.constant 0 : index
    %c0_57 = arith.constant 0 : index
    %99 = vector.load %arg5[%c2_55, %c0_56, %c0_57] : memref<4x1x16xf32, #tpu.memory_space<vmem>>, vector<1x1x16xf32>
    %100 = vector.shape_cast %99 : vector<1x1x16xf32> to vector<1x16xf32>
    %101 = vector.broadcast %100 : vector<1x16xf32> to vector<2x16xf32>
    %102 = arith.addf %98, %101 : vector<2x16xf32>
    %103 = vector.extract_strided_slice %102 {offsets = [0, 0], sizes = [2, 8], strides = [1, 1]} : vector<2x16xf32> to vector<2x8xf32>
    %104 = math.tanh %103 : vector<2x8xf32>
    %105 = vector.broadcast %83 : vector<1x8xf32> to vector<2x8xf32>
    %106 = arith.mulf %104, %105 : vector<2x8xf32>
    %107 = vector.extract_strided_slice %102 {offsets = [0, 8], sizes = [2, 8], strides = [1, 1]} : vector<2x16xf32> to vector<2x8xf32>
    %108 = vector.broadcast %83 : vector<1x8xf32> to vector<2x8xf32>
    %109 = arith.mulf %107, %108 : vector<2x8xf32>
    %110 = vector.broadcast %83 : vector<1x8xf32> to vector<2x8xf32>
    %111 = arith.mulf %110, %76 : vector<2x8xf32>
    %112 = math.exp %106 : vector<2x8xf32>
    %113 = arith.mulf %111, %112 : vector<2x8xf32>
    %114 = arith.addf %85, %113 : vector<2x8xf32>
    %115 = arith.addf %114, %109 : vector<2x8xf32>
    %cst_58 = arith.constant dense<0.000000e+00> : vector<2xf32>
    %116 = vector.multi_reduction <add>, %106, %cst_58 [1] : vector<2x8xf32> to vector<2xf32>
    %117 = vector.shape_cast %116 : vector<2xf32> to vector<2x1xf32>
    %118 = arith.addf %79, %117 : vector<2x1xf32>
    %c3 = arith.constant 3 : index
    %c0_59 = arith.constant 0 : index
    %c0_60 = arith.constant 0 : index
    %119 = vector.load %arg1[%c3, %c0_59, %c0_60] : memref<4x1x8xf32, #tpu.memory_space<vmem>>, vector<1x1x8xf32>
    %120 = vector.shape_cast %119 : vector<1x1x8xf32> to vector<1x8xf32>
    %cst_61 = arith.constant 1.000000e+00 : f32
    %121 = vector.broadcast %cst_61 : f32 to vector<1x8xf32>
    %122 = arith.subf %121, %120 : vector<1x8xf32>
    %123 = vector.broadcast %120 : vector<1x8xf32> to vector<2x8xf32>
    %124 = arith.mulf %115, %123 : vector<2x8xf32>
    %c3_62 = arith.constant 3 : index
    %c0_63 = arith.constant 0 : index
    %c0_64 = arith.constant 0 : index
    %125 = vector.load %arg2[%c3_62, %c0_63, %c0_64] : memref<4x8x64xf32, #tpu.memory_space<vmem>>, vector<1x8x64xf32>
    %126 = vector.shape_cast %125 : vector<1x8x64xf32> to vector<8x64xf32>
    %cst_65 = arith.constant dense<0.000000e+00> : vector<2x64xf32>
    %127 = tpu.matmul %124, %126, %cst_65 {dimension_numbers = #tpu.dot_dimension_numbers<[1], [0], [0], [1], [0, 0, 1, 1], [], []>} : vector<2x8xf32>, vector<8x64xf32>, vector<2x64xf32> -> vector<2x64xf32>
    %c3_66 = arith.constant 3 : index
    %c0_67 = arith.constant 0 : index
    %c0_68 = arith.constant 0 : index
    %128 = vector.load %arg3[%c3_66, %c0_67, %c0_68] : memref<4x1x64xf32, #tpu.memory_space<vmem>>, vector<1x1x64xf32>
    %129 = vector.shape_cast %128 : vector<1x1x64xf32> to vector<1x64xf32>
    %130 = vector.broadcast %129 : vector<1x64xf32> to vector<2x64xf32>
    %131 = arith.addf %127, %130 : vector<2x64xf32>
    %cst_69 = arith.constant 0.00999999977 : f32
    %132 = vector.broadcast %cst_69 : f32 to vector<2x64xf32>
    %133 = arith.mulf %132, %131 : vector<2x64xf32>
    %134 = arith.maximumf %131, %133 : vector<2x64xf32>
    %c3_70 = arith.constant 3 : index
    %c0_71 = arith.constant 0 : index
    %c0_72 = arith.constant 0 : index
    %135 = vector.load %arg4[%c3_70, %c0_71, %c0_72] : memref<4x64x16xf32, #tpu.memory_space<vmem>>, vector<1x64x16xf32>
    %136 = vector.shape_cast %135 : vector<1x64x16xf32> to vector<64x16xf32>
    %cst_73 = arith.constant dense<0.000000e+00> : vector<2x16xf32>
    %137 = tpu.matmul %134, %136, %cst_73 {dimension_numbers = #tpu.dot_dimension_numbers<[1], [0], [0], [1], [0, 0, 1, 1], [], []>} : vector<2x64xf32>, vector<64x16xf32>, vector<2x16xf32> -> vector<2x16xf32>
    %c3_74 = arith.constant 3 : index
    %c0_75 = arith.constant 0 : index
    %c0_76 = arith.constant 0 : index
    %138 = vector.load %arg5[%c3_74, %c0_75, %c0_76] : memref<4x1x16xf32, #tpu.memory_space<vmem>>, vector<1x1x16xf32>
    %139 = vector.shape_cast %138 : vector<1x1x16xf32> to vector<1x16xf32>
    %140 = vector.broadcast %139 : vector<1x16xf32> to vector<2x16xf32>
    %141 = arith.addf %137, %140 : vector<2x16xf32>
    %142 = vector.extract_strided_slice %141 {offsets = [0, 0], sizes = [2, 8], strides = [1, 1]} : vector<2x16xf32> to vector<2x8xf32>
    %143 = math.tanh %142 : vector<2x8xf32>
    %144 = vector.broadcast %122 : vector<1x8xf32> to vector<2x8xf32>
    %145 = arith.mulf %143, %144 : vector<2x8xf32>
    %146 = vector.extract_strided_slice %141 {offsets = [0, 8], sizes = [2, 8], strides = [1, 1]} : vector<2x16xf32> to vector<2x8xf32>
    %147 = vector.broadcast %122 : vector<1x8xf32> to vector<2x8xf32>
    %148 = arith.mulf %146, %147 : vector<2x8xf32>
    %149 = vector.broadcast %122 : vector<1x8xf32> to vector<2x8xf32>
    %150 = arith.mulf %149, %115 : vector<2x8xf32>
    %151 = math.exp %145 : vector<2x8xf32>
    %152 = arith.mulf %150, %151 : vector<2x8xf32>
    %153 = arith.addf %124, %152 : vector<2x8xf32>
    %154 = arith.addf %153, %148 : vector<2x8xf32>
    %cst_77 = arith.constant dense<0.000000e+00> : vector<2xf32>
    %155 = vector.multi_reduction <add>, %145, %cst_77 [1] : vector<2x8xf32> to vector<2xf32>
    %156 = vector.shape_cast %155 : vector<2xf32> to vector<2x1xf32>
    %157 = arith.addf %118, %156 : vector<2x1xf32>
    %c0_78 = arith.constant 0 : index
    %c0_79 = arith.constant 0 : index
    %158 = vector.load %arg6[%c0_78, %c0_79] : memref<2x8xf32, #tpu.memory_space<vmem>>, vector<2x8xf32>
    tpu.vector_store %arg6[%c0_78, %c0_79], %154 {strides = array<i32>} : memref<2x8xf32, #tpu.memory_space<vmem>>, vector<2x8xf32>,
    %c0_80 = arith.constant 0 : index
    %c0_81 = arith.constant 0 : index
    %159 = vector.load %arg7[%c0_80, %c0_81] : memref<2x1xf32, #tpu.memory_space<vmem>>, vector<2x1xf32>
    tpu.vector_store %arg7[%c0_80, %c0_81], %157 {strides = array<i32>} : memref<2x1xf32, #tpu.memory_space<vmem>>, vector<2x1xf32>,
    return
  }
}

</mosaic_0001>

<llo_original>
// kernel: tpu_custom_call.1
$region0: #{tpu_custom_call.1}
  #allocation0 [shape = 'u32[]', space=smem, size = 0x4, offset = 0x4, fixed_abs, tag = 'smem constant byte address 0x4 - core index']
  #allocation1 [shape = 'u32[144,128]{1,0:T(1,128)}', space=vmem, size = 0x12000, scoped, tag = 'internal scratch']
  %s0 = inlined_call_operand.vmem [shape: f32[2,8], index: 0, kind: input, shape index: {}]
  %s1 = inlined_call_operand.vmem [shape: f32[4,1,8], index: 1, kind: input, shape index: {}]
  %s2 = inlined_call_operand.vmem [shape: f32[4,8,64], index: 2, kind: input, shape index: {}]
  %s3 = inlined_call_operand.vmem [shape: f32[4,1,64], index: 3, kind: input, shape index: {}]
  %s4 = inlined_call_operand.vmem [shape: f32[4,64,16], index: 4, kind: input, shape index: {}]
  %s5 = inlined_call_operand.vmem [shape: f32[4,1,16], index: 5, kind: input, shape index: {}]
  %s6 = inlined_call_operand.hbm [shape: f32[2,8], index: 6, kind: output, shape index: {0}]
  %s7 = inlined_call_operand.vmem [shape: f32[2,1], index: 7, kind: output, shape index: {1}]
  %8 = xla_tuple %s6, %s7
  %s9 = sld [smem:[#allocation0]]
  $region42: #{tpu_custom_call.1} parent=0
    _
  %s11 = ssub.s32 1, %s9
  %s12 = scalar_select 0, %s11, %s9
  $region1: #{tpu_custom_call.1} parent=0
    #allocation2 [shape = 'u8[1024]{0}', space=vmem, size = 0x400, scoped, tag = 'output window, operand 0, single buffered']
    #allocation3 [shape = 's32[1]{0}', space=sflag, size = 0x4, scoped, tag = 'scoped memory for tpu_custom_call.1']
    %13 = vsyncpa [#allocation3], 0
    // Predicated region
    $region2: #{tpu_custom_call.1} parent=1 // pred_check
      _
    $region3: #{tpu_custom_call.1} parent=1 // pred_check_branch
      %15 = sbr.rel (0) target = $region5
    $region4: #{tpu_custom_call.1} parent=1 // pred_region
      _
    $region5: #{tpu_custom_call.1} parent=1 // pred_fallthru
      _
    // Predicated region
    $region6: #{tpu_custom_call.1} parent=1 // pred_check
      _
    $region7: #{tpu_custom_call.1} parent=1 // pred_check_branch
      %17 = sbr.rel (0) target = $region9
    $region8: #{tpu_custom_call.1} parent=1 // pred_region
      _
    $region9: #{tpu_custom_call.1} parent=1 // pred_fallthru
      _
    // Predicated region
    $region10: #{tpu_custom_call.1} parent=1 // pred_check
      _
    $region11: #{tpu_custom_call.1} parent=1 // pred_check_branch
      %19 = sbr.rel (0) target = $region13
    $region12: #{tpu_custom_call.1} parent=1 // pred_region
      _
    $region13: #{tpu_custom_call.1} parent=1 // pred_fallthru
      _
    // Predicated region
    $region14: #{tpu_custom_call.1} parent=1 // pred_check
      _
    $region15: #{tpu_custom_call.1} parent=1 // pred_check_branch
      %21 = sbr.rel (0) target = $region17
    $region16: #{tpu_custom_call.1} parent=1 // pred_region
      _
    $region17: #{tpu_custom_call.1} parent=1 // pred_fallthru
      _
    // Predicated region
    $region18: #{tpu_custom_call.1} parent=1 // pred_check
      _
    $region19: #{tpu_custom_call.1} parent=1 // pred_check_branch
      %23 = sbr.rel (0) target = $region21
    $region20: #{tpu_custom_call.1} parent=1 // pred_region
      _
    $region21: #{tpu_custom_call.1} parent=1 // pred_fallthru
      _
    // Predicated region
    $region22: #{tpu_custom_call.1} parent=1 // pred_check
      _
    $region23: #{tpu_custom_call.1} parent=1 // pred_check_branch
      %25 = sbr.rel (0) target = $region25
    $region24: #{tpu_custom_call.1} parent=1 // pred_region
      _
    $region25: #{tpu_custom_call.1} parent=1 // pred_fallthru
      _
    %v26 = vld [vmem:[%s0] sm:$0x3]
    %v27 = vld [vmem:[%s1] sm:$0x1]
    %v28 = vsub.f32 1.0, %v27
    %v30 = vlaneseq
    %v31 = vshrl.u32 %v30, 7
    %v32 = vsub.s32 0, %v31
    %v33 = vrot.slane %v27, %v32
    %v35 = vmul.f32 %v26, %v33
    %v36 = vld [vmem:[%s2] sm:$0xff]
    %v37 = vld [vmem:[%s3] sm:$0x1]
    %v39 = vlaneseq
    %v40 = vshrl.u32 %v39, 7
    %v41 = vsub.s32 0, %v40
    %v42 = vrot.slane %v37, %v41
    %vm44 = vcmask 64512
    %v46 = vsel %vm44, %v35, 0
    %48 = vmatprep.subr.mxu0 0.0
    %49 = vmatpush1.msra.mxu0 %v36
    %50 = vmatprep.subr.mxu0 0.0
    %51 = vmatpush1.msra.mxu0 0.0
    %52 = vmatprep.subr.mxu0 0.0
    %53 = vmatpush1.msra.mxu0 0.0
    %54 = vmatprep.subr.mxu0 0.0
    %55 = vmatpush1.msra.mxu0 0.0
    %56 = vmatprep.subr.mxu0 0.0
    %57 = vmatpush1.msra.mxu0 0.0
    %58 = vmatprep.subr.mxu0 0.0
    %59 = vmatpush1.msra.mxu0 0.0
    %60 = vmatprep.subr.mxu0 0.0
    %61 = vmatpush1.msra.mxu0 0.0
    %62 = vmatprep.subr.mxu0 0.0
    %63 = vmatpush1.msra.mxu0 0.0
    %64 = vmatprep.subr.mxu0 0.0
    %65 = vmatpush1.msra.mxu0 0.0
    %66 = vmatprep.subr.mxu0 0.0
    %67 = vmatpush1.msra.mxu0 0.0
    %68 = vmatprep.subr.mxu0 0.0
    %69 = vmatpush1.msra.mxu0 0.0
    %70 = vmatprep.subr.mxu0 0.0
    %71 = vmatpush1.msra.mxu0 0.0
    %72 = vmatprep.subr.mxu0 0.0
    %73 = vmatpush1.msra.mxu0 0.0
    %74 = vmatprep.subr.mxu0 0.0
    %75 = vmatpush1.msra.mxu0 0.0
    %76 = vmatprep.subr.mxu0 0.0
    %77 = vmatpush1.msra.mxu0 0.0
    %78 = vmatprep.subr.mxu0 0.0
    %79 = vmatpush1.msra.mxu0 0.0
    %80 = vmatprep.subr.mxu0 0.0
    %81 = vmatpush1.msra.mxu0 0.0
    %82 = vmatprep.subr.mxu0 0.0
    %83 = vmatpush1.msra.mxu0 0.0
    %84 = vmatprep.subr.mxu0 0.0
    %85 = vmatpush1.msra.mxu0 0.0
    %86 = vmatprep.subr.mxu0 0.0
    %87 = vmatpush1.msra.mxu0 0.0
    %88 = vmatprep.subr.mxu0 0.0
    %89 = vmatpush1.msra.mxu0 0.0
    %90 = vmatprep.subr.mxu0 0.0
    %91 = vmatpush1.msra.mxu0 0.0
    %92 = vmatprep.subr.mxu0 0.0
    %93 = vmatpush1.msra.mxu0 0.0
    %94 = vmatprep.subr.mxu0 0.0
    %95 = vmatpush1.msra.mxu0 0.0
    %96 = vmatprep.subr.mxu0 0.0
    %97 = vmatpush1.msra.mxu0 0.0
    %98 = vmatprep.subr.mxu0 0.0
    %99 = vmatpush1.msra.mxu0 0.0
    %100 = vmatprep.subr.mxu0 0.0
    %101 = vmatpush1.msra.mxu0 0.0
    %102 = vmatprep.subr.mxu0 0.0
    %103 = vmatpush1.msra.mxu0 0.0
    %104 = vmatprep.subr.mxu0 0.0
    %105 = vmatpush1.msra.mxu0 0.0
    %106 = vmatprep.subr.mxu0 0.0
    %107 = vmatpush1.msra.mxu0 0.0
    %108 = vmatprep.subr.mxu0 0.0
    %109 = vmatpush1.msra.mxu0 0.0
    %110 = vmatprep.subr.mxu0 0.0
    %111 = vmatpush1.msra.mxu0 0.0
    %112 = vmatprep.mubr.f32.mxu0 0.0
    %113 = vmatmul.mubr.f32.gmra.mrb[0].mxu0 %v46
    %v114 = vpop.f32.mrb[0].mxu0
    %v115 = vadd.f32 %v42, %v114
    %v116 = vpop.f32.mrb[0].mxu0
    %117 = vdwg.mxu0
    %v118 = vmul.f32 %v115, 0.01
    %v119 = vmax.f32 %v115, %v118
    %v120 = vld [vmem:[%s4] sm:$0xff]
    %v121 = vld [vmem:[%s4 + $0x8] sm:$0xff]
    %v122 = vld [vmem:[%s4 + $0x10] sm:$0xff]
    %v123 = vld [vmem:[%s4 + $0x18] sm:$0xff]
    %v124 = vld [vmem:[%s4 + $0x20] sm:$0xff]
    %v125 = vld [vmem:[%s4 + $0x28] sm:$0xff]
    %v126 = vld [vmem:[%s4 + $0x30] sm:$0xff]
    %v127 = vld [vmem:[%s4 + $0x38] sm:$0xff]
    %v128 = vld [vmem:[%s5] sm:$0x1]
    %v130 = vlaneseq
    %v131 = vshrl.u32 %v130, 7
    %v132 = vsub.s32 0, %v131
    %v133 = vrot.slane %v128, %v132
    %vm135 = vcmask 523264
    %v137 = vsel %vm135, %v119, 0
    %139 = vmatprep.subr.mxu0 0.0
    %140 = vmatpush1.msra.mxu0 %v120
    %141 = vmatprep.subr.mxu0 0.0
    %142 = vmatpush1.msra.mxu0 %v121
    %143 = vmatprep.subr.mxu0 0.0
    %144 = vmatpush1.msra.mxu0 %v122
    %145 = vmatprep.subr.mxu0 0.0
    %146 = vmatpush1.msra.mxu0 %v123
    %147 = vmatprep.subr.mxu0 0.0
    %148 = vmatpush1.msra.mxu0 %v124
    %149 = vmatprep.subr.mxu0 0.0
    %150 = vmatpush1.msra.mxu0 %v125
    %151 = vmatprep.subr.mxu0 0.0
    %152 = vmatpush1.msra.mxu0 %v126
    %153 = vmatprep.subr.mxu0 0.0
    %154 = vmatpush1.msra.mxu0 %v127
    %155 = vmatprep.subr.mxu0 0.0
    %156 = vmatpush1.msra.mxu0 0.0
    %157 = vmatprep.subr.mxu0 0.0
    %158 = vmatpush1.msra.mxu0 0.0
    %159 = vmatprep.subr.mxu0 0.0
    %160 = vmatpush1.msra.mxu0 0.0
    %161 = vmatprep.subr.mxu0 0.0
    %162 = vmatpush1.msra.mxu0 0.0
    %163 = vmatprep.subr.mxu0 0.0
    %164 = vmatpush1.msra.mxu0 0.0
    %165 = vmatprep.subr.mxu0 0.0
    %166 = vmatpush1.msra.mxu0 0.0
    %167 = vmatprep.subr.mxu0 0.0
    %168 = vmatpush1.msra.mxu0 0.0
    %169 = vmatprep.subr.mxu0 0.0
    %170 = vmatpush1.msra.mxu0 0.0
    %171 = vmatprep.subr.mxu0 0.0
    %172 = vmatpush1.msra.mxu0 0.0
    %173 = vmatprep.subr.mxu0 0.0
    %174 = vmatpush1.msra.mxu0 0.0
    %175 = vmatprep.subr.mxu0 0.0
    %176 = vmatpush1.msra.mxu0 0.0
    %177 = vmatprep.subr.mxu0 0.0
    %178 = vmatpush1.msra.mxu0 0.0
    %179 = vmatprep.subr.mxu0 0.0
    %180 = vmatpush1.msra.mxu0 0.0
    %181 = vmatprep.subr.mxu0 0.0
    %182 = vmatpush1.msra.mxu0 0.0
    %183 = vmatprep.subr.mxu0 0.0
    %184 = vmatpush1.msra.mxu0 0.0
    %185 = vmatprep.subr.mxu0 0.0
    %186 = vmatpush1.msra.mxu0 0.0
    %187 = vmatprep.subr.mxu0 0.0
    %188 = vmatpush1.msra.mxu0 0.0
    %189 = vmatprep.subr.mxu0 0.0
    %190 = vmatpush1.msra.mxu0 0.0
    %191 = vmatprep.subr.mxu0 0.0
    %192 = vmatpush1.msra.mxu0 0.0
    %193 = vmatprep.subr.mxu0 0.0
    %194 = vmatpush1.msra.mxu0 0.0
    %195 = vmatprep.subr.mxu0 0.0
    %196 = vmatpush1.msra.mxu0 0.0
    %197 = vmatprep.subr.mxu0 0.0
    %198 = vmatpush1.msra.mxu0 0.0
    %199 = vmatprep.subr.mxu0 0.0
    %200 = vmatpush1.msra.mxu0 0.0
    %201 = vmatprep.subr.mxu0 0.0
    %202 = vmatpush1.msra.mxu0 0.0
    %203 = vmatprep.mubr.f32.mxu0 0.0
    %204 = vmatmul.mubr.f32.gmra.mrb[0].mxu0 %v137
    %v205 = vpop.f32.mrb[0].mxu0
    %v206 = vadd.f32 %v133, %v205
    %v207 = vpop.f32.mrb[0].mxu0
    %208 = vdwg.mxu0
    %v209 = vtanh.pop %v206
    %v211 = vlaneseq
    %v212 = vshrl.u32 %v211, 7
    %v213 = vsub.s32 0, %v212
    %v214 = vrot.slane %v28, %v213
    %v216 = vmul.f32 %v209, %v214
    %217 = vrot.lane.b32.xlu0 %v214, 8
    %v218 = vpop.permute.xlu0 %217
    %v220 = vmul.f32 %v206, %v218
    %v221 = vmul.f32 %v214, %v26
    %v222 = vmul.f32 %v216, 1.442695
    %v223 = vpow.pop %v222
    %v224 = vmul.f32 %v221, %v223
    %v225 = vadd.f32 %v35, %v224
    %227 = vrot.lane.b32.xlu0 %v220, 120
    %v228 = vpop.permute.xlu0 %227
    %v230 = vadd.f32 %v225, %v228
    %vm231 = vcmask 58368
    %v232 = vsel %vm231, %v216, 0.0
    %233 = vadd.xlane.f32.xlu0 %v232
    %v234 = vpop.xlane.xlu0 %233
    %v235 = vadd.f32 %v234, 0.0
    %s236 = scalar_lea.vmem %s1, 1
    %v237 = vld [vmem:[%s236] sm:$0x1]
    %v238 = vsub.f32 1.0, %v237
    %v240 = vlaneseq
    %v241 = vshrl.u32 %v240, 7
    %v242 = vsub.s32 0, %v241
    %v243 = vrot.slane %v237, %v242
    %v245 = vmul.f32 %v230, %v243
    %s246 = scalar_lea.vmem %s2, 8
    %v247 = vld [vmem:[%s246] sm:$0xff]
    %s248 = scalar_lea.vmem %s3, 1
    %v249 = vld [vmem:[%s248] sm:$0x1]
    %v251 = vlaneseq
    %v252 = vshrl.u32 %v251, 7
    %v253 = vsub.s32 0, %v252
    %v254 = vrot.slane %v249, %v253
    %v257 = vsel %vm44, %v245, 0
    %259 = vmatprep.subr.mxu0 0.0
    %260 = vmatpush1.msra.mxu0 %v247
    %261 = vmatprep.subr.mxu0 0.0
    %262 = vmatpush1.msra.mxu0 0.0
    %263 = vmatprep.subr.mxu0 0.0
    %264 = vmatpush1.msra.mxu0 0.0
    %265 = vmatprep.subr.mxu0 0.0
    %266 = vmatpush1.msra.mxu0 0.0
    %267 = vmatprep.subr.mxu0 0.0
    %268 = vmatpush1.msra.mxu0 0.0
    %269 = vmatprep.subr.mxu0 0.0
    %270 = vmatpush1.msra.mxu0 0.0
    %271 = vmatprep.subr.mxu0 0.0
    %272 = vmatpush1.msra.mxu0 0.0
    %273 = vmatprep.subr.mxu0 0.0
    %274 = vmatpush1.msra.mxu0 0.0
    %275 = vmatprep.subr.mxu0 0.0
    %276 = vmatpush1.msra.mxu0 0.0
    %277 = vmatprep.subr.mxu0 0.0
    %278 = vmatpush1.msra.mxu0 0.0
    %279 = vmatprep.subr.mxu0 0.0
    %280 = vmatpush1.msra.mxu0 0.0
    %281 = vmatprep.subr.mxu0 0.0
    %282 = vmatpush1.msra.mxu0 0.0
    %283 = vmatprep.subr.mxu0 0.0
    %284 = vmatpush1.msra.mxu0 0.0
    %285 = vmatprep.subr.mxu0 0.0
    %286 = vmatpush1.msra.mxu0 0.0
    %287 = vmatprep.subr.mxu0 0.0
    %288 = vmatpush1.msra.mxu0 0.0
    %289 = vmatprep.subr.mxu0 0.0
    %290 = vmatpush1.msra.mxu0 0.0
    %291 = vmatprep.subr.mxu0 0.0
    %292 = vmatpush1.msra.mxu0 0.0
    %293 = vmatprep.subr.mxu0 0.0
    %294 = vmatpush1.msra.mxu0 0.0
    %295 = vmatprep.subr.mxu0 0.0
    %296 = vmatpush1.msra.mxu0 0.0
    %297 = vmatprep.subr.mxu0 0.0
    %298 = vmatpush1.msra.mxu0 0.0
    %299 = vmatprep.subr.mxu0 0.0
    %300 = vmatpush1.msra.mxu0 0.0
    %301 = vmatprep.subr.mxu0 0.0
    %302 = vmatpush1.msra.mxu0 0.0
    %303 = vmatprep.subr.mxu0 0.0
    %304 = vmatpush1.msra.mxu0 0.0
    %305 = vmatprep.subr.mxu0 0.0
    %306 = vmatpush1.msra.mxu0 0.0
    %307 = vmatprep.subr.mxu0 0.0
    %308 = vmatpush1.msra.mxu0 0.0
    %309 = vmatprep.subr.mxu0 0.0
    %310 = vmatpush1.msra.mxu0 0.0
    %311 = vmatprep.subr.mxu0 0.0
    %312 = vmatpush1.msra.mxu0 0.0
    %313 = vmatprep.subr.mxu0 0.0
    %314 = vmatpush1.msra.mxu0 0.0
    %315 = vmatprep.subr.mxu0 0.0
    %316 = vmatpush1.msra.mxu0 0.0
    %317 = vmatprep.subr.mxu0 0.0
    %318 = vmatpush1.msra.mxu0 0.0
    %319 = vmatprep.subr.mxu0 0.0
    %320 = vmatpush1.msra.mxu0 0.0
    %321 = vmatprep.subr.mxu0 0.0
    %322 = vmatpush1.msra.mxu0 0.0
    %323 = vmatprep.mubr.f32.mxu0 0.0
    %324 = vmatmul.mubr.f32.gmra.mrb[0].mxu0 %v257
    %v325 = vpop.f32.mrb[0].mxu0
    %v326 = vadd.f32 %v254, %v325
    %v327 = vpop.f32.mrb[0].mxu0
    %328 = vdwg.mxu0
    %v329 = vmul.f32 %v326, 0.01
    %v330 = vmax.f32 %v326, %v329
    %s331 = scalar_lea.vmem %s4, 64
    %v332 = vld [vmem:[%s331] sm:$0xff]
    %v333 = vld [vmem:[%s331 + $0x8] sm:$0xff]
    %v334 = vld [vmem:[%s331 + $0x10] sm:$0xff]
    %v335 = vld [vmem:[%s331 + $0x18] sm:$0xff]
    %v336 = vld [vmem:[%s331 + $0x20] sm:$0xff]
    %v337 = vld [vmem:[%s331 + $0x28] sm:$0xff]
    %v338 = vld [vmem:[%s331 + $0x30] sm:$0xff]
    %v339 = vld [vmem:[%s331 + $0x38] sm:$0xff]
    %s340 = scalar_lea.vmem %s5, 1
    %v341 = vld [vmem:[%s340] sm:$0x1]
    %v343 = vlaneseq
    %v344 = vshrl.u32 %v343, 7
    %v345 = vsub.s32 0, %v344
    %v346 = vrot.slane %v341, %v345
    %v349 = vsel %vm135, %v330, 0
    %351 = vmatprep.subr.mxu0 0.0
    %352 = vmatpush1.msra.mxu0 %v332
    %353 = vmatprep.subr.mxu0 0.0
    %354 = vmatpush1.msra.mxu0 %v333
    %355 = vmatprep.subr.mxu0 0.0
    %356 = vmatpush1.msra.mxu0 %v334
    %357 = vmatprep.subr.mxu0 0.0
    %358 = vmatpush1.msra.mxu0 %v335
    %359 = vmatprep.subr.mxu0 0.0
    %360 = vmatpush1.msra.mxu0 %v336
    %361 = vmatprep.subr.mxu0 0.0
    %362 = vmatpush1.msra.mxu0 %v337
    %363 = vmatprep.subr.mxu0 0.0
    %364 = vmatpush1.msra.mxu0 %v338
    %365 = vmatprep.subr.mxu0 0.0
    %366 = vmatpush1.msra.mxu0 %v339
    %367 = vmatprep.subr.mxu0 0.0
    %368 = vmatpush1.msra.mxu0 0.0
    %369 = vmatprep.subr.mxu0 0.0
    %370 = vmatpush1.msra.mxu0 0.0
    %371 = vmatprep.subr.mxu0 0.0
    %372 = vmatpush1.msra.mxu0 0.0
    %373 = vmatprep.subr.mxu0 0.0
    %374 = vmatpush1.msra.mxu0 0.0
    %375 = vmatprep.subr.mxu0 0.0
    %376 = vmatpush1.msra.mxu0 0.0
    %377 = vmatprep.subr.mxu0 0.0
    %378 = vmatpush1.msra.mxu0 0.0
    %379 = vmatprep.subr.mxu0 0.0
    %380 = vmatpush1.msra.mxu0 0.0
    %381 = vmatprep.subr.mxu0 0.0
    %382 = vmatpush1.msra.mxu0 0.0
    %383 = vmatprep.subr.mxu0 0.0
    %384 = vmatpush1.msra.mxu0 0.0
    %385 = vmatprep.subr.mxu0 0.0
    %386 = vmatpush1.msra.mxu0 0.0
    %387 = vmatprep.subr.mxu0 0.0
    %388 = vmatpush1.msra.mxu0 0.0
    %389 = vmatprep.subr.mxu0 0.0
    %390 = vmatpush1.msra.mxu0 0.0
    %391 = vmatprep.subr.mxu0 0.0
    %392 = vmatpush1.msra.mxu0 0.0
    %393 = vmatprep.subr.mxu0 0.0
    %394 = vmatpush1.msra.mxu0 0.0
    %395 = vmatprep.subr.mxu0 0.0
    %396 = vmatpush1.msra.mxu0 0.0
    %397 = vmatprep.subr.mxu0 0.0
    %398 = vmatpush1.msra.mxu0 0.0
    %399 = vmatprep.subr.mxu0 0.0
    %400 = vmatpush1.msra.mxu0 0.0
    %401 = vmatprep.subr.mxu0 0.0
    %402 = vmatpush1.msra.mxu0 0.0
    %403 = vmatprep.subr.mxu0 0.0
    %404 = vmatpush1.msra.mxu0 0.0
    %405 = vmatprep.subr.mxu0 0.0
    %406 = vmatpush1.msra.mxu0 0.0
    %407 = vmatprep.subr.mxu0 0.0
    %408 = vmatpush1.msra.mxu0 0.0
    %409 = vmatprep.subr.mxu0 0.0
    %410 = vmatpush1.msra.mxu0 0.0
    %411 = vmatprep.subr.mxu0 0.0
    %412 = vmatpush1.msra.mxu0 0.0
    %413 = vmatprep.subr.mxu0 0.0
    %414 = vmatpush1.msra.mxu0 0.0
    %415 = vmatprep.mubr.f32.mxu0 0.0
    %416 = vmatmul.mubr.f32.gmra.mrb[0].mxu0 %v349
    %v417 = vpop.f32.mrb[0].mxu0
    %v418 = vadd.f32 %v346, %v417
    %v419 = vpop.f32.mrb[0].mxu0
    %420 = vdwg.mxu0
    %v421 = vtanh.pop %v418
    %v423 = vlaneseq
    %v424 = vshrl.u32 %v423, 7
    %v425 = vsub.s32 0, %v424
    %v426 = vrot.slane %v238, %v425
    %v428 = vmul.f32 %v421, %v426
    %429 = vrot.lane.b32.xlu0 %v426, 8
    %v430 = vpop.permute.xlu0 %429
    %v432 = vmul.f32 %v418, %v430
    %v433 = vmul.f32 %v426, %v230
    %v434 = vmul.f32 %v428, 1.442695
    %v435 = vpow.pop %v434
    %v436 = vmul.f32 %v433, %v435
    %v437 = vadd.f32 %v245, %v436
    %439 = vrot.lane.b32.xlu0 %v432, 120
    %v440 = vpop.permute.xlu0 %439
    %v442 = vadd.f32 %v437, %v440
    %v443 = vsel %vm231, %v428, 0.0
    %444 = vadd.xlane.f32.xlu0 %v443
    %v445 = vpop.xlane.xlu0 %444
    %v446 = vadd.f32 %v235, %v445
    %s447 = scalar_lea.vmem %s1, 2
    %v448 = vld [vmem:[%s447] sm:$0x1]
    %v449 = vsub.f32 1.0, %v448
    %v451 = vlaneseq
    %v452 = vshrl.u32 %v451, 7
    %v453 = vsub.s32 0, %v452
    %v454 = vrot.slane %v448, %v453
    %v456 = vmul.f32 %v442, %v454
    %s457 = scalar_lea.vmem %s2, 16
    %v458 = vld [vmem:[%s457] sm:$0xff]
    %s459 = scalar_lea.vmem %s3, 2
    %v460 = vld [vmem:[%s459] sm:$0x1]
    %v462 = vlaneseq
    %v463 = vshrl.u32 %v462, 7
    %v464 = vsub.s32 0, %v463
    %v465 = vrot.slane %v460, %v464
    %v468 = vsel %vm44, %v456, 0
    %470 = vmatprep.subr.mxu0 0.0
    %471 = vmatpush1.msra.mxu0 %v458
    %472 = vmatprep.subr.mxu0 0.0
    %473 = vmatpush1.msra.mxu0 0.0
    %474 = vmatprep.subr.mxu0 0.0
    %475 = vmatpush1.msra.mxu0 0.0
    %476 = vmatprep.subr.mxu0 0.0
    %477 = vmatpush1.msra.mxu0 0.0
    %478 = vmatprep.subr.mxu0 0.0
    %479 = vmatpush1.msra.mxu0 0.0
    %480 = vmatprep.subr.mxu0 0.0
    %481 = vmatpush1.msra.mxu0 0.0
    %482 = vmatprep.subr.mxu0 0.0
    %483 = vmatpush1.msra.mxu0 0.0
    %484 = vmatprep.subr.mxu0 0.0
    %485 = vmatpush1.msra.mxu0 0.0
    %486 = vmatprep.subr.mxu0 0.0
    %487 = vmatpush1.msra.mxu0 0.0
    %488 = vmatprep.subr.mxu0 0.0
    %489 = vmatpush1.msra.mxu0 0.0
    %490 = vmatprep.subr.mxu0 0.0
    %491 = vmatpush1.msra.mxu0 0.0
    %492 = vmatprep.subr.mxu0 0.0
    %493 = vmatpush1.msra.mxu0 0.0
    %494 = vmatprep.subr.mxu0 0.0
    %495 = vmatpush1.msra.mxu0 0.0
    %496 = vmatprep.subr.mxu0 0.0
    %497 = vmatpush1.msra.mxu0 0.0
    %498 = vmatprep.subr.mxu0 0.0
    %499 = vmatpush1.msra.mxu0 0.0
    %500 = vmatprep.subr.mxu0 0.0
    %501 = vmatpush1.msra.mxu0 0.0
    %502 = vmatprep.subr.mxu0 0.0
    %503 = vmatpush1.msra.mxu0 0.0
    %504 = vmatprep.subr.mxu0 0.0
    %505 = vmatpush1.msra.mxu0 0.0
    %506 = vmatprep.subr.mxu0 0.0
    %507 = vmatpush1.msra.mxu0 0.0
    %508 = vmatprep.subr.mxu0 0.0
    %509 = vmatpush1.msra.mxu0 0.0
    %510 = vmatprep.subr.mxu0 0.0
    %511 = vmatpush1.msra.mxu0 0.0
    %512 = vmatprep.subr.mxu0 0.0
    %513 = vmatpush1.msra.mxu0 0.0
    %514 = vmatprep.subr.mxu0 0.0
    %515 = vmatpush1.msra.mxu0 0.0
    %516 = vmatprep.subr.mxu0 0.0
    %517 = vmatpush1.msra.mxu0 0.0
    %518 = vmatprep.subr.mxu0 0.0
    %519 = vmatpush1.msra.mxu0 0.0
    %520 = vmatprep.subr.mxu0 0.0
    %521 = vmatpush1.msra.mxu0 0.0
    %522 = vmatprep.subr.mxu0 0.0
    %523 = vmatpush1.msra.mxu0 0.0
    %524 = vmatprep.subr.mxu0 0.0
    %525 = vmatpush1.msra.mxu0 0.0
    %526 = vmatprep.subr.mxu0 0.0
    %527 = vmatpush1.msra.mxu0 0.0
    %528 = vmatprep.subr.mxu0 0.0
    %529 = vmatpush1.msra.mxu0 0.0
    %530 = vmatprep.subr.mxu0 0.0
    %531 = vmatpush1.msra.mxu0 0.0
    %532 = vmatprep.subr.mxu0 0.0
    %533 = vmatpush1.msra.mxu0 0.0
    %534 = vmatprep.mubr.f32.mxu0 0.0
    %535 = vmatmul.mubr.f32.gmra.mrb[0].mxu0 %v468
    %v536 = vpop.f32.mrb[0].mxu0
    %v537 = vadd.f32 %v465, %v536
    %v538 = vpop.f32.mrb[0].mxu0
    %539 = vdwg.mxu0
    %v540 = vmul.f32 %v537, 0.01
    %v541 = vmax.f32 %v537, %v540
    %s542 = scalar_lea.vmem %s4, 128
    %v543 = vld [vmem:[%s542] sm:$0xff]
    %v544 = vld [vmem:[%s542 + $0x8] sm:$0xff]
    %v545 = vld [vmem:[%s542 + $0x10] sm:$0xff]
    %v546 = vld [vmem:[%s542 + $0x18] sm:$0xff]
    %v547 = vld [vmem:[%s542 + $0x20] sm:$0xff]
    %v548 = vld [vmem:[%s542 + $0x28] sm:$0xff]
    %v549 = vld [vmem:[%s542 + $0x30] sm:$0xff]
    %v550 = vld [vmem:[%s542 + $0x38] sm:$0xff]
    %s551 = scalar_lea.vmem %s5, 2
    %v552 = vld [vmem:[%s551] sm:$0x1]
    %v554 = vlaneseq
    %v555 = vshrl.u32 %v554, 7
    %v556 = vsub.s32 0, %v555
    %v557 = vrot.slane %v552, %v556
    %v560 = vsel %vm135, %v541, 0
    %562 = vmatprep.subr.mxu0 0.0
    %563 = vmatpush1.msra.mxu0 %v543
    %564 = vmatprep.subr.mxu0 0.0
    %565 = vmatpush1.msra.mxu0 %v544
    %566 = vmatprep.subr.mxu0 0.0
    %567 = vmatpush1.msra.mxu0 %v545
    %568 = vmatprep.subr.mxu0 0.0
    %569 = vmatpush1.msra.mxu0 %v546
    %570 = vmatprep.subr.mxu0 0.0
    %571 = vmatpush1.msra.mxu0 %v547
    %572 = vmatprep.subr.mxu0 0.0
    %573 = vmatpush1.msra.mxu0 %v548
    %574 = vmatprep.subr.mxu0 0.0
    %575 = vmatpush1.msra.mxu0 %v549
    %576 = vmatprep.subr.mxu0 0.0
    %577 = vmatpush1.msra.mxu0 %v550
    %578 = vmatprep.subr.mxu0 0.0
    %579 = vmatpush1.msra.mxu0 0.0
    %580 = vmatprep.subr.mxu0 0.0
    %581 = vmatpush1.msra.mxu0 0.0
    %582 = vmatprep.subr.mxu0 0.0
    %583 = vmatpush1.msra.mxu0 0.0
    %584 = vmatprep.subr.mxu0 0.0
    %585 = vmatpush1.msra.mxu0 0.0
    %586 = vmatprep.subr.mxu0 0.0
    %587 = vmatpush1.msra.mxu0 0.0
    %588 = vmatprep.subr.mxu0 0.0
    %589 = vmatpush1.msra.mxu0 0.0
    %590 = vmatprep.subr.mxu0 0.0
    %591 = vmatpush1.msra.mxu0 0.0
    %592 = vmatprep.subr.mxu0 0.0
    %593 = vmatpush1.msra.mxu0 0.0
    %594 = vmatprep.subr.mxu0 0.0
    %595 = vmatpush1.msra.mxu0 0.0
    %596 = vmatprep.subr.mxu0 0.0
    %597 = vmatpush1.msra.mxu0 0.0
    %598 = vmatprep.subr.mxu0 0.0
    %599 = vmatpush1.msra.mxu0 0.0
    %600 = vmatprep.subr.mxu0 0.0
    %601 = vmatpush1.msra.mxu0 0.0
    %602 = vmatprep.subr.mxu0 0.0
    %603 = vmatpush1.msra.mxu0 0.0
    %604 = vmatprep.subr.mxu0 0.0
    %605 = vmatpush1.msra.mxu0 0.0
    %606 = vmatprep.subr.mxu0 0.0
    %607 = vmatpush1.msra.mxu0 0.0
    %608 = vmatprep.subr.mxu0 0.0
    %609 = vmatpush1.msra.mxu0 0.0
    %610 = vmatprep.subr.mxu0 0.0
    %611 = vmatpush1.msra.mxu0 0.0
    %612 = vmatprep.subr.mxu0 0.0
    %613 = vmatpush1.msra.mxu0 0.0
    %614 = vmatprep.subr.mxu0 0.0
    %615 = vmatpush1.msra.mxu0 0.0
    %616 = vmatprep.subr.mxu0 0.0
    %617 = vmatpush1.msra.mxu0 0.0
    %618 = vmatprep.subr.mxu0 0.0
    %619 = vmatpush1.msra.mxu0 0.0
    %620 = vmatprep.subr.mxu0 0.0
    %621 = vmatpush1.msra.mxu0 0.0
    %622 = vmatprep.subr.mxu0 0.0
    %623 = vmatpush1.msra.mxu0 0.0
    %624 = vmatprep.subr.mxu0 0.0
    %625 = vmatpush1.msra.mxu0 0.0
    %626 = vmatprep.mubr.f32.mxu0 0.0
    %627 = vmatmul.mubr.f32.gmra.mrb[0].mxu0 %v560
    %v628 = vpop.f32.mrb[0].mxu0
    %v629 = vadd.f32 %v557, %v628
    %v630 = vpop.f32.mrb[0].mxu0
    %631 = vdwg.mxu0
    %v632 = vtanh.pop %v629
    %v634 = vlaneseq
    %v635 = vshrl.u32 %v634, 7
    %v636 = vsub.s32 0, %v635
    %v637 = vrot.slane %v449, %v636
    %v639 = vmul.f32 %v632, %v637
    %640 = vrot.lane.b32.xlu0 %v637, 8
    %v641 = vpop.permute.xlu0 %640
    %v643 = vmul.f32 %v629, %v641
    %v644 = vmul.f32 %v637, %v442
    %v645 = vmul.f32 %v639, 1.442695
    %v646 = vpow.pop %v645
    %v647 = vmul.f32 %v644, %v646
    %v648 = vadd.f32 %v456, %v647
    %650 = vrot.lane.b32.xlu0 %v643, 120
    %v651 = vpop.permute.xlu0 %650
    %v653 = vadd.f32 %v648, %v651
    %v654 = vsel %vm231, %v639, 0.0
    %655 = vadd.xlane.f32.xlu0 %v654
    %v656 = vpop.xlane.xlu0 %655
    %v657 = vadd.f32 %v446, %v656
    %s658 = scalar_lea.vmem %s1, 3
    %v659 = vld [vmem:[%s658] sm:$0x1]
    %v660 = vsub.f32 1.0, %v659
    %v662 = vlaneseq
    %v663 = vshrl.u32 %v662, 7
    %v664 = vsub.s32 0, %v663
    %v665 = vrot.slane %v659, %v664
    %v667 = vmul.f32 %v653, %v665
    %s668 = scalar_lea.vmem %s2, 24
    %v669 = vld [vmem:[%s668] sm:$0xff]
    %s670 = scalar_lea.vmem %s3, 3
    %v671 = vld [vmem:[%s670] sm:$0x1]
    %v673 = vlaneseq
    %v674 = vshrl.u32 %v673, 7
    %v675 = vsub.s32 0, %v674
    %v676 = vrot.slane %v671, %v675
    %v679 = vsel %vm44, %v667, 0
    %681 = vmatprep.subr.mxu0 0.0
    %682 = vmatpush1.msra.mxu0 %v669
    %683 = vmatprep.subr.mxu0 0.0
    %684 = vmatpush1.msra.mxu0 0.0
    %685 = vmatprep.subr.mxu0 0.0
    %686 = vmatpush1.msra.mxu0 0.0
    %687 = vmatprep.subr.mxu0 0.0
    %688 = vmatpush1.msra.mxu0 0.0
    %689 = vmatprep.subr.mxu0 0.0
    %690 = vmatpush1.msra.mxu0 0.0
    %691 = vmatprep.subr.mxu0 0.0
    %692 = vmatpush1.msra.mxu0 0.0
    %693 = vmatprep.subr.mxu0 0.0
    %694 = vmatpush1.msra.mxu0 0.0
    %695 = vmatprep.subr.mxu0 0.0
    %696 = vmatpush1.msra.mxu0 0.0
    %697 = vmatprep.subr.mxu0 0.0
    %698 = vmatpush1.msra.mxu0 0.0
    %699 = vmatprep.subr.mxu0 0.0
    %700 = vmatpush1.msra.mxu0 0.0
    %701 = vmatprep.subr.mxu0 0.0
    %702 = vmatpush1.msra.mxu0 0.0
    %703 = vmatprep.subr.mxu0 0.0
    %704 = vmatpush1.msra.mxu0 0.0
    %705 = vmatprep.subr.mxu0 0.0
    %706 = vmatpush1.msra.mxu0 0.0
    %707 = vmatprep.subr.mxu0 0.0
    %708 = vmatpush1.msra.mxu0 0.0
    %709 = vmatprep.subr.mxu0 0.0
    %710 = vmatpush1.msra.mxu0 0.0
    %711 = vmatprep.subr.mxu0 0.0
    %712 = vmatpush1.msra.mxu0 0.0
    %713 = vmatprep.subr.mxu0 0.0
    %714 = vmatpush1.msra.mxu0 0.0
    %715 = vmatprep.subr.mxu0 0.0
    %716 = vmatpush1.msra.mxu0 0.0
    %717 = vmatprep.subr.mxu0 0.0
    %718 = vmatpush1.msra.mxu0 0.0
    %719 = vmatprep.subr.mxu0 0.0
    %720 = vmatpush1.msra.mxu0 0.0
    %721 = vmatprep.subr.mxu0 0.0
    %722 = vmatpush1.msra.mxu0 0.0
    %723 = vmatprep.subr.mxu0 0.0
    %724 = vmatpush1.msra.mxu0 0.0
    %725 = vmatprep.subr.mxu0 0.0
    %726 = vmatpush1.msra.mxu0 0.0
    %727 = vmatprep.subr.mxu0 0.0
    %728 = vmatpush1.msra.mxu0 0.0
    %729 = vmatprep.subr.mxu0 0.0
    %730 = vmatpush1.msra.mxu0 0.0
    %731 = vmatprep.subr.mxu0 0.0
    %732 = vmatpush1.msra.mxu0 0.0
    %733 = vmatprep.subr.mxu0 0.0
    %734 = vmatpush1.msra.mxu0 0.0
    %735 = vmatprep.subr.mxu0 0.0
    %736 = vmatpush1.msra.mxu0 0.0
    %737 = vmatprep.subr.mxu0 0.0
    %738 = vmatpush1.msra.mxu0 0.0
    %739 = vmatprep.subr.mxu0 0.0
    %740 = vmatpush1.msra.mxu0 0.0
    %741 = vmatprep.subr.mxu0 0.0
    %742 = vmatpush1.msra.mxu0 0.0
    %743 = vmatprep.subr.mxu0 0.0
    %744 = vmatpush1.msra.mxu0 0.0
    %745 = vmatprep.mubr.f32.mxu0 0.0
    %746 = vmatmul.mubr.f32.gmra.mrb[0].mxu0 %v679
    %v747 = vpop.f32.mrb[0].mxu0
    %v748 = vadd.f32 %v676, %v747
    %v749 = vpop.f32.mrb[0].mxu0
    %750 = vdwg.mxu0
    %v751 = vmul.f32 %v748, 0.01
    %v752 = vmax.f32 %v748, %v751
    %s753 = scalar_lea.vmem %s4, 192
    %v754 = vld [vmem:[%s753] sm:$0xff]
    %v755 = vld [vmem:[%s753 + $0x8] sm:$0xff]
    %v756 = vld [vmem:[%s753 + $0x10] sm:$0xff]
    %v757 = vld [vmem:[%s753 + $0x18] sm:$0xff]
    %v758 = vld [vmem:[%s753 + $0x20] sm:$0xff]
    %v759 = vld [vmem:[%s753 + $0x28] sm:$0xff]
    %v760 = vld [vmem:[%s753 + $0x30] sm:$0xff]
    %v761 = vld [vmem:[%s753 + $0x38] sm:$0xff]
    %s762 = scalar_lea.vmem %s5, 3
    %v763 = vld [vmem:[%s762] sm:$0x1]
    %v765 = vlaneseq
    %v766 = vshrl.u32 %v765, 7
    %v767 = vsub.s32 0, %v766
    %v768 = vrot.slane %v763, %v767
    %v771 = vsel %vm135, %v752, 0
    %773 = vmatprep.subr.mxu0 0.0
    %774 = vmatpush1.msra.mxu0 %v754
    %775 = vmatprep.subr.mxu0 0.0
    %776 = vmatpush1.msra.mxu0 %v755
    %777 = vmatprep.subr.mxu0 0.0
    %778 = vmatpush1.msra.mxu0 %v756
    %779 = vmatprep.subr.mxu0 0.0
    %780 = vmatpush1.msra.mxu0 %v757
    %781 = vmatprep.subr.mxu0 0.0
    %782 = vmatpush1.msra.mxu0 %v758
    %783 = vmatprep.subr.mxu0 0.0
    %784 = vmatpush1.msra.mxu0 %v759
    %785 = vmatprep.subr.mxu0 0.0
    %786 = vmatpush1.msra.mxu0 %v760
    %787 = vmatprep.subr.mxu0 0.0
    %788 = vmatpush1.msra.mxu0 %v761
    %789 = vmatprep.subr.mxu0 0.0
    %790 = vmatpush1.msra.mxu0 0.0
    %791 = vmatprep.subr.mxu0 0.0
    %792 = vmatpush1.msra.mxu0 0.0
    %793 = vmatprep.subr.mxu0 0.0
    %794 = vmatpush1.msra.mxu0 0.0
    %795 = vmatprep.subr.mxu0 0.0
    %796 = vmatpush1.msra.mxu0 0.0
    %797 = vmatprep.subr.mxu0 0.0
    %798 = vmatpush1.msra.mxu0 0.0
    %799 = vmatprep.subr.mxu0 0.0
    %800 = vmatpush1.msra.mxu0 0.0
    %801 = vmatprep.subr.mxu0 0.0
    %802 = vmatpush1.msra.mxu0 0.0
    %803 = vmatprep.subr.mxu0 0.0
    %804 = vmatpush1.msra.mxu0 0.0
    %805 = vmatprep.subr.mxu0 0.0
    %806 = vmatpush1.msra.mxu0 0.0
    %807 = vmatprep.subr.mxu0 0.0
    %808 = vmatpush1.msra.mxu0 0.0
    %809 = vmatprep.subr.mxu0 0.0
    %810 = vmatpush1.msra.mxu0 0.0
    %811 = vmatprep.subr.mxu0 0.0
    %812 = vmatpush1.msra.mxu0 0.0
    %813 = vmatprep.subr.mxu0 0.0
    %814 = vmatpush1.msra.mxu0 0.0
    %815 = vmatprep.subr.mxu0 0.0
    %816 = vmatpush1.msra.mxu0 0.0
    %817 = vmatprep.subr.mxu0 0.0
    %818 = vmatpush1.msra.mxu0 0.0
    %819 = vmatprep.subr.mxu0 0.0
    %820 = vmatpush1.msra.mxu0 0.0
    %821 = vmatprep.subr.mxu0 0.0
    %822 = vmatpush1.msra.mxu0 0.0
    %823 = vmatprep.subr.mxu0 0.0
    %824 = vmatpush1.msra.mxu0 0.0
    %825 = vmatprep.subr.mxu0 0.0
    %826 = vmatpush1.msra.mxu0 0.0
    %827 = vmatprep.subr.mxu0 0.0
    %828 = vmatpush1.msra.mxu0 0.0
    %829 = vmatprep.subr.mxu0 0.0
    %830 = vmatpush1.msra.mxu0 0.0
    %831 = vmatprep.subr.mxu0 0.0
    %832 = vmatpush1.msra.mxu0 0.0
    %833 = vmatprep.subr.mxu0 0.0
    %834 = vmatpush1.msra.mxu0 0.0
    %835 = vmatprep.subr.mxu0 0.0
    %836 = vmatpush1.msra.mxu0 0.0
    %837 = vmatprep.mubr.f32.mxu0 0.0
    %838 = vmatmul.mubr.f32.gmra.mrb[0].mxu0 %v771
    %v839 = vpop.f32.mrb[0].mxu0
    %v840 = vadd.f32 %v768, %v839
    %v841 = vpop.f32.mrb[0].mxu0
    %842 = vdwg.mxu0
    %v843 = vtanh.pop %v840
    %v845 = vlaneseq
    %v846 = vshrl.u32 %v845, 7
    %v847 = vsub.s32 0, %v846
    %v848 = vrot.slane %v660, %v847
    %v850 = vmul.f32 %v843, %v848
    %851 = vrot.lane.b32.xlu0 %v848, 8
    %v852 = vpop.permute.xlu0 %851
    %v854 = vmul.f32 %v840, %v852
    %v855 = vmul.f32 %v848, %v653
    %v856 = vmul.f32 %v850, 1.442695
    %v857 = vpow.pop %v856
    %v858 = vmul.f32 %v855, %v857
    %v859 = vadd.f32 %v667, %v858
    %861 = vrot.lane.b32.xlu0 %v854, 120
    %v862 = vpop.permute.xlu0 %861
    %v864 = vadd.f32 %v859, %v862
    %v865 = vsel %vm231, %v850, 0.0
    %866 = vadd.xlane.f32.xlu0 %v865
    %v867 = vpop.xlane.xlu0 %866
    %v868 = vadd.f32 %v657, %v867
    %869 = vst.msk [vmem:[#allocation2] sm:$0x3] %vm231, %v864
    %vm870 = vcmask 1024
    %871 = vst.msk [vmem:[%s7] sm:$0x3] %vm870, %v868
    // Predicated region
    $region26: #{tpu_custom_call.1} parent=1 // pred_check
      _
    $region27: #{tpu_custom_call.1} parent=1 // pred_check_branch
      %873 = sbr.rel (0) target = $region29
    $region28: #{tpu_custom_call.1} parent=1 // pred_region
      %s875 = ssub.s32 32, 32
      %876 = vsyncadd [#allocation3], %s875
      %s878 = sshll.u32 [#allocation2], 4
      %s879 = int_to_ptr.vmem [resolvable:$true] %s878
      %881 = dma.vmem_to_hbm [thread:$0]  %s879, 32, %s6, [#allocation3]
    $region29: #{tpu_custom_call.1} parent=1 // pred_fallthru
      _
    // Predicated region
    $region30: #{tpu_custom_call.1} parent=1 // pred_check
      _
    $region31: #{tpu_custom_call.1} parent=1 // pred_check_branch
      %883 = sbr.rel (0) target = $region33
    $region32: #{tpu_custom_call.1} parent=1 // pred_region
      _
    $region33: #{tpu_custom_call.1} parent=1 // pred_fallthru
      _
    // Predicated region
    $region34: #{tpu_custom_call.1} parent=1 // pred_check
      _
    $region35: #{tpu_custom_call.1} parent=1 // pred_check_branch
      %885 = sbr.rel (0) target = $region37
    $region36: #{tpu_custom_call.1} parent=1 // pred_region
      %886 = dma.done [#allocation3], 32
    $region37: #{tpu_custom_call.1} parent=1 // pred_fallthru
      _
    // Predicated region
    $region38: #{tpu_custom_call.1} parent=1 // pred_check
      _
    $region39: #{tpu_custom_call.1} parent=1 // pred_check_branch
      %888 = sbr.rel (0) target = $region41
    $region40: #{tpu_custom_call.1} parent=1 // pred_region
      _
    $region41: #{tpu_custom_call.1} parent=1 // pred_fallthru
      _
    %889 = vsyncpa [#allocation3], 1

</llo_original>
